<compile_context>
chip_gen: v7x
topology: tpu7x:2x2x1
jax: 0.10.0
libtpu: 0.0.40
codegen_flags: <defaults>
</compile_context>

<pallas_src>
import jax
import jax.numpy as jnp
from jax import lax
from jax.experimental import pallas as pl
from jax.experimental.pallas import tpu as pltpu


def _round_up(x, m):
    return (x + m - 1) // m * m


def _embedding_kernel(idx_ref, mean_tbl_ref, covar_tbl_ref,
                      mean_out_ref, covar_out_ref):
    # idx_ref       : (1, T, 1) int32  — token ids for this block (T on sublanes)
    # mean_tbl_ref  : (n_words, D)     — VMEM-resident for the whole grid
    # covar_tbl_ref : (n_words, D)     — VMEM-resident for the whole grid
    # mean_out_ref  : (T, D)
    # covar_out_ref : (T, D)
    T = mean_out_ref.shape[0]
    n_words = mean_tbl_ref.shape[0]

    idx_col = idx_ref[0]                                           # (T, 1) int32
    word_iota = lax.broadcasted_iota(jnp.int32, (T, n_words), 1)   # (T, n_words)
    one_hot = (idx_col == word_iota).astype(mean_tbl_ref.dtype)    # (T, n_words)

    # Gather on the MXU: (T, n_words) @ (n_words, D) -> (T, D), f32 accumulate.
    mean = jnp.dot(one_hot, mean_tbl_ref[...],
                   preferred_element_type=jnp.float32)
    c = jnp.dot(one_hot, covar_tbl_ref[...],
                preferred_element_type=jnp.float32)

    mean_out_ref[...] = mean.astype(mean_out_ref.dtype)
    # Numerically-stable softplus, computed in f32 on VPU/EUP.
    sp = jnp.maximum(c, 0.0) + jnp.log1p(jnp.exp(-jnp.abs(c)))
    covar_out_ref[...] = sp.astype(covar_out_ref.dtype)


def embedding_layer_forward(x, mean_table, covar_table, *, block_tokens=256):
    """Pallas implementation of EmbeddingLayer.forward.

    x           : int array of arbitrary shape (token indices)
    mean_table  : (n_words, latent_dim) float32
    covar_table : (n_words, latent_dim) float32
    returns (mean, covar), each of shape x.shape + (latent_dim,)
    """
    n_words, latent_dim = mean_table.shape
    orig_shape = x.shape

    # Flatten and clamp indices (avoids any possibility of OOB table access).
    idx = jnp.clip(x.reshape(-1).astype(jnp.int32), 0, n_words - 1)
    n = idx.shape[0]

    # Token block size: big enough to amortize grid overhead, multiple of 8.
    T = block_tokens if n >= block_tokens else _round_up(max(n, 1), 8)
    n_pad = _round_up(n, T)
    n_blocks = n_pad // T

    # Pad with index 0 (valid row); padded rows are sliced off afterwards.
    idx_padded = jnp.zeros((n_pad,), jnp.int32).at[:n].set(idx)
    idx_blocks = idx_padded.reshape(n_blocks, T, 1)

    grid_spec = pltpu.PrefetchScalarGridSpec(
        num_scalar_prefetch=0,
        grid=(n_blocks,),
        in_specs=[
            # Per-block token ids; trailing block dims equal the array's dims.
            pl.BlockSpec((1, T, 1), lambda i: (i, 0, 0)),
            # Tables: constant block index -> fetched from HBM once, VMEM-resident.
            pl.BlockSpec((n_words, latent_dim), lambda i: (0, 0)),
            pl.BlockSpec((n_words, latent_dim), lambda i: (0, 0)),
        ],
        out_specs=[
            pl.BlockSpec((T, latent_dim), lambda i: (i, 0)),
            pl.BlockSpec((T, latent_dim), lambda i: (i, 0)),
        ],
    )

    mean_flat, covar_flat = pl.pallas_call(
        _embedding_kernel,
        out_shape=(
            jax.ShapeDtypeStruct((n_pad, latent_dim), mean_table.dtype),
            jax.ShapeDtypeStruct((n_pad, latent_dim), covar_table.dtype),
        ),
        grid_spec=grid_spec,
        compiler_params=pltpu.CompilerParams(
            # Token blocks are independent: shard across TCs on v7x.
            dimension_semantics=("parallel",)),
    )(idx_blocks, mean_table, covar_table)

    out_shape = orig_shape + (latent_dim,)
    return (mean_flat[:n].reshape(out_shape),
            covar_flat[:n].reshape(out_shape))


if __name__ == "__main__":
    # Deterministic synthetic parameters (module __init__: normal(std=initial_sigma)).
    n_words = 64
    latent_dim = 32
    initial_sigma = 1.0

    key = jax.random.PRNGKey(0)
    k_mean, k_covar, k_idx = jax.random.split(key, 3)

    mean_table = (initial_sigma *
                  jax.random.normal(k_mean, (n_words, latent_dim), jnp.float32))
    covar_table = (initial_sigma *
                   jax.random.normal(k_covar, (n_words, latent_dim), jnp.float32))

    # Small index batch: (batch=2, seq=8)
    x = jax.random.randint(k_idx, (2, 8), 0, n_words, dtype=jnp.int32)

    mean_out, covar_out = embedding_layer_forward(x, mean_table, covar_table)
    jax.block_until_ready(mean_out)
    jax.block_until_ready(covar_out)

    # Reference check in plain JAX (lookup + softplus).
    ref_mean = mean_table[x]
    ref_covar = jax.nn.softplus(covar_table[x])
    assert mean_out.shape == (2, 8, latent_dim)
    assert covar_out.shape == (2, 8, latent_dim)
    assert jnp.allclose(mean_out, ref_mean, atol=1e-5)
    assert jnp.allclose(covar_out, ref_covar, atol=1e-5)

    print("KERNEL_OK")
</pallas_src>

<mosaic_0001>
module attributes {stable_mosaic.version = 11 : i64} {
  func.func @_embedding_kernel(%arg0: i32, %arg1: memref<1x16x1xi32, #tpu.memory_space<vmem>>, %arg2: memref<64x32xf32, #tpu.memory_space<vmem>>, %arg3: memref<64x32xf32, #tpu.memory_space<vmem>>, %arg4: memref<16x32xf32, #tpu.memory_space<vmem>>, %arg5: memref<16x32xf32, #tpu.memory_space<vmem>>) attributes {dimension_semantics = [#tpu.dimension_semantics<parallel>], iteration_bounds = array<i64: 1>, scalar_prefetch = 0 : i64, scratch_operands = 0 : i64, tpu.core_type = #tpu.core_type<tc>, window_params = [{transform_indices = @transform_0, window_bounds = array<i64: 1, 16, 1>}, {pipeline_mode = #tpu.pipeline_mode<synchronous>, transform_indices = @transform_1, window_bounds = array<i64: 64, 32>}, {pipeline_mode = #tpu.pipeline_mode<synchronous>, transform_indices = @transform_2, window_bounds = array<i64: 64, 32>}, {transform_indices = @transform_3, window_bounds = array<i64: 16, 32>}, {transform_indices = @transform_4, window_bounds = array<i64: 16, 32>}]} {
    %c0 = arith.constant 0 : index
    %c0_0 = arith.constant 0 : index
    %c0_1 = arith.constant 0 : index
    %0 = vector.load %arg1[%c0, %c0_0, %c0_1] : memref<1x16x1xi32, #tpu.memory_space<vmem>>, vector<1x16x1xi32>
    %1 = vector.shape_cast %0 : vector<1x16x1xi32> to vector<16x1xi32>
    %2 = tpu.iota {dimensions = array<i32: 1>} : vector<16x64xi32>
    %3 = vector.broadcast %1 : vector<16x1xi32> to vector<16x64xi32>
    %4 = arith.cmpi eq, %3, %2 : vector<16x64xi32>
    %5 = arith.extui %4 : vector<16x64xi1> to vector<16x64xi32>
    %6 = arith.sitofp %5 : vector<16x64xi32> to vector<16x64xf32>
    %c0_2 = arith.constant 0 : index
    %c0_3 = arith.constant 0 : index
    %7 = vector.load %arg2[%c0_2, %c0_3] : memref<64x32xf32, #tpu.memory_space<vmem>>, vector<64x32xf32>
    %cst = arith.constant dense<0.000000e+00> : vector<16x32xf32>
    %8 = tpu.matmul %6, %7, %cst {dimension_numbers = #tpu.dot_dimension_numbers<[1], [0], [0], [1], [0, 0, 1, 1], [], []>} : vector<16x64xf32>, vector<64x32xf32>, vector<16x32xf32> -> vector<16x32xf32>
    %c0_4 = arith.constant 0 : index
    %c0_5 = arith.constant 0 : index
    %9 = vector.load %arg3[%c0_4, %c0_5] : memref<64x32xf32, #tpu.memory_space<vmem>>, vector<64x32xf32>
    %cst_6 = arith.constant dense<0.000000e+00> : vector<16x32xf32>
    %10 = tpu.matmul %6, %9, %cst_6 {dimension_numbers = #tpu.dot_dimension_numbers<[1], [0], [0], [1], [0, 0, 1, 1], [], []>} : vector<16x64xf32>, vector<64x32xf32>, vector<16x32xf32> -> vector<16x32xf32>
    %c0_7 = arith.constant 0 : index
    %c0_8 = arith.constant 0 : index
    %11 = vector.load %arg4[%c0_7, %c0_8] : memref<16x32xf32, #tpu.memory_space<vmem>>, vector<16x32xf32>
    tpu.vector_store %arg4[%c0_7, %c0_8], %8 {strides = array<i32>} : memref<16x32xf32, #tpu.memory_space<vmem>>, vector<16x32xf32>,
    %cst_9 = arith.constant 0.000000e+00 : f32
    %12 = vector.broadcast %cst_9 : f32 to vector<16x32xf32>
    %13 = arith.maximumf %10, %12 : vector<16x32xf32>
    %14 = math.absf %10 : vector<16x32xf32>
    %cst_10 = arith.constant 0.000000e+00 : f32
    %15 = vector.broadcast %cst_10 : f32 to vector<16x32xf32>
    %16 = arith.subf %15, %14 : vector<16x32xf32>
    %17 = math.exp %16 : vector<16x32xf32>
    %18 = math.log1p %17 : vector<16x32xf32>
    %19 = arith.addf %13, %18 : vector<16x32xf32>
    %c0_11 = arith.constant 0 : index
    %c0_12 = arith.constant 0 : index
    %20 = vector.load %arg5[%c0_11, %c0_12] : memref<16x32xf32, #tpu.memory_space<vmem>>, vector<16x32xf32>
    tpu.vector_store %arg5[%c0_11, %c0_12], %19 {strides = array<i32>} : memref<16x32xf32, #tpu.memory_space<vmem>>, vector<16x32xf32>,
    return
  }
  func.func @transform_0(%arg0: i32) -> (i32, i32, i32) {
    %c0_i32 = arith.constant 0 : i32
    %c0_i32_0 = arith.constant 0 : i32
    %c0_i32_1 = arith.constant 0 : i32
    return %arg0, %c0_i32, %c0_i32_0 : i32, i32, i32
  }
  func.func @transform_1(%arg0: i32) -> (i32, i32) {
    %c0_i32 = arith.constant 0 : i32
    %c0_i32_0 = arith.constant 0 : i32
    %c0_i32_1 = arith.constant 0 : i32
    return %c0_i32, %c0_i32_0 : i32, i32
  }
  func.func @transform_2(%arg0: i32) -> (i32, i32) {
    %c0_i32 = arith.constant 0 : i32
    %c0_i32_0 = arith.constant 0 : i32
    %c0_i32_1 = arith.constant 0 : i32
    return %c0_i32, %c0_i32_0 : i32, i32
  }
  func.func @transform_3(%arg0: i32) -> (i32, i32) {
    %c0_i32 = arith.constant 0 : i32
    %c0_i32_0 = arith.constant 0 : i32
    return %arg0, %c0_i32 : i32, i32
  }
  func.func @transform_4(%arg0: i32) -> (i32, i32) {
    %c0_i32 = arith.constant 0 : i32
    %c0_i32_0 = arith.constant 0 : i32
    return %arg0, %c0_i32 : i32, i32
  }
}

</mosaic_0001>

<llo_original>
// kernel: tpu_custom_call.1
$region0: #{tpu_custom_call.1}
  #allocation0 [shape = 'u32[]', space=smem, size = 0x4, offset = 0x4, fixed_abs, tag = 'smem constant byte address 0x4 - core index']
  #allocation1 [shape = 'u32[144,128]{1,0:T(1,128)}', space=vmem, size = 0x12000, scoped, tag = 'internal scratch']
  %s0 = inlined_call_operand.vmem [shape: s32[1,16,1], index: 0, kind: input, shape index: {}]
  %s1 = inlined_call_operand.vmem [shape: f32[64,32], index: 1, kind: input, shape index: {}]
  %s2 = inlined_call_operand.vmem [shape: f32[64,32], index: 2, kind: input, shape index: {}]
  %s3 = inlined_call_operand.hbm [shape: f32[16,32], index: 3, kind: output, shape index: {0}]
  %s4 = inlined_call_operand.hbm [shape: f32[16,32], index: 4, kind: output, shape index: {1}]
  %5 = xla_tuple %s3, %s4
  %s6 = sld [smem:[#allocation0]]
  $region30: #{tpu_custom_call.1} parent=0
    _
  %s8 = ssub.s32 1, %s6
  %s9 = scalar_select 0, %s8, %s6
  $region1: #{tpu_custom_call.1} parent=0
    #allocation2 [shape = 'u8[8192]{0}', space=vmem, size = 0x2000, scoped, tag = 'output window, operand 0, single buffered']
    #allocation3 [shape = 's32[1]{0}', space=sflag, size = 0x4, scoped, tag = 'scoped memory for tpu_custom_call.1']
    #allocation4 [shape = 'u8[8192]{0}', space=vmem, size = 0x2000, scoped, tag = 'output window, operand 1, single buffered']
    #allocation5 [shape = 's32[1]{0}', space=sflag, size = 0x4, scoped, tag = 'scoped memory for tpu_custom_call.1']
    %10 = vsyncpa [#allocation3], 0
    %11 = vsyncpa [#allocation5], 0
    // Predicated region
    $region2: #{tpu_custom_call.1} parent=1 // pred_check
      _
    $region3: #{tpu_custom_call.1} parent=1 // pred_check_branch
      %13 = sbr.rel (0) target = $region5
    $region4: #{tpu_custom_call.1} parent=1 // pred_region
      _
    $region5: #{tpu_custom_call.1} parent=1 // pred_fallthru
      _
    // Predicated region
    $region6: #{tpu_custom_call.1} parent=1 // pred_check
      _
    $region7: #{tpu_custom_call.1} parent=1 // pred_check_branch
      %15 = sbr.rel (0) target = $region9
    $region8: #{tpu_custom_call.1} parent=1 // pred_region
      _
    $region9: #{tpu_custom_call.1} parent=1 // pred_fallthru
      _
    // Predicated region
    $region10: #{tpu_custom_call.1} parent=1 // pred_check
      _
    $region11: #{tpu_custom_call.1} parent=1 // pred_check_branch
      %17 = sbr.rel (0) target = $region13
    $region12: #{tpu_custom_call.1} parent=1 // pred_region
      _
    $region13: #{tpu_custom_call.1} parent=1 // pred_fallthru
      _
    %v18 = vld [vmem:[%s0] sm:$0xff]
    %v19 = vld [vmem:[%s0 + $0x8] sm:$0xff]
    %v20 = vlaneseq
    %v21 = vand.u32 %v20, 127
    %22 = vset.pattern.permute.xlu0 0
    %23 = vperm.xlu0 %22, %v18
    %v24 = vpop.permute.xlu0 %23
    %25 = vset.pattern.permute.xlu0 0
    %26 = vperm.xlu0 %25, %v19
    %v27 = vpop.permute.xlu0 %26
    %vm28 = vcmp.eq.s32.totalorder %v24, %v21
    %vm29 = vcmp.eq.s32.totalorder %v27, %v21
    %v30 = vsel %vm28, 1, 0
    %v31 = vsel %vm29, 1, 0
    %v32 = vcvt.s32.f32 %v30
    %v33 = vcvt.s32.f32 %v31
    %v34 = vld [vmem:[%s1] sm:$0xff]
    %v35 = vld [vmem:[%s1 + $0x8] sm:$0xff]
    %v36 = vld [vmem:[%s1 + $0x10] sm:$0xff]
    %v37 = vld [vmem:[%s1 + $0x18] sm:$0xff]
    %v38 = vld [vmem:[%s1 + $0x20] sm:$0xff]
    %v39 = vld [vmem:[%s1 + $0x28] sm:$0xff]
    %v40 = vld [vmem:[%s1 + $0x30] sm:$0xff]
    %v41 = vld [vmem:[%s1 + $0x38] sm:$0xff]
    %vm42 = vcmask 523264
    %v44 = vsel %vm42, %v32, 0
    %v47 = vsel %vm42, %v33, 0
    %49 = vmatprep.subr.mxu0 0.0
    %50 = vmatpush1.msra.mxu0 %v34
    %51 = vmatprep.subr.mxu0 0.0
    %52 = vmatpush1.msra.mxu0 %v35
    %53 = vmatprep.subr.mxu0 0.0
    %54 = vmatpush1.msra.mxu0 %v36
    %55 = vmatprep.subr.mxu0 0.0
    %56 = vmatpush1.msra.mxu0 %v37
    %57 = vmatprep.subr.mxu0 0.0
    %58 = vmatpush1.msra.mxu0 %v38
    %59 = vmatprep.subr.mxu0 0.0
    %60 = vmatpush1.msra.mxu0 %v39
    %61 = vmatprep.subr.mxu0 0.0
    %62 = vmatpush1.msra.mxu0 %v40
    %63 = vmatprep.subr.mxu0 0.0
    %64 = vmatpush1.msra.mxu0 %v41
    %65 = vmatprep.subr.mxu0 0.0
    %66 = vmatpush1.msra.mxu0 0.0
    %67 = vmatprep.subr.mxu0 0.0
    %68 = vmatpush1.msra.mxu0 0.0
    %69 = vmatprep.subr.mxu0 0.0
    %70 = vmatpush1.msra.mxu0 0.0
    %71 = vmatprep.subr.mxu0 0.0
    %72 = vmatpush1.msra.mxu0 0.0
    %73 = vmatprep.subr.mxu0 0.0
    %74 = vmatpush1.msra.mxu0 0.0
    %75 = vmatprep.subr.mxu0 0.0
    %76 = vmatpush1.msra.mxu0 0.0
    %77 = vmatprep.subr.mxu0 0.0
    %78 = vmatpush1.msra.mxu0 0.0
    %79 = vmatprep.subr.mxu0 0.0
    %80 = vmatpush1.msra.mxu0 0.0
    %81 = vmatprep.subr.mxu0 0.0
    %82 = vmatpush1.msra.mxu0 0.0
    %83 = vmatprep.subr.mxu0 0.0
    %84 = vmatpush1.msra.mxu0 0.0
    %85 = vmatprep.subr.mxu0 0.0
    %86 = vmatpush1.msra.mxu0 0.0
    %87 = vmatprep.subr.mxu0 0.0
    %88 = vmatpush1.msra.mxu0 0.0
    %89 = vmatprep.subr.mxu0 0.0
    %90 = vmatpush1.msra.mxu0 0.0
    %91 = vmatprep.subr.mxu0 0.0
    %92 = vmatpush1.msra.mxu0 0.0
    %93 = vmatprep.subr.mxu0 0.0
    %94 = vmatpush1.msra.mxu0 0.0
    %95 = vmatprep.subr.mxu0 0.0
    %96 = vmatpush1.msra.mxu0 0.0
    %97 = vmatprep.subr.mxu0 0.0
    %98 = vmatpush1.msra.mxu0 0.0
    %99 = vmatprep.subr.mxu0 0.0
    %100 = vmatpush1.msra.mxu0 0.0
    %101 = vmatprep.subr.mxu0 0.0
    %102 = vmatpush1.msra.mxu0 0.0
    %103 = vmatprep.subr.mxu0 0.0
    %104 = vmatpush1.msra.mxu0 0.0
    %105 = vmatprep.subr.mxu0 0.0
    %106 = vmatpush1.msra.mxu0 0.0
    %107 = vmatprep.subr.mxu0 0.0
    %108 = vmatpush1.msra.mxu0 0.0
    %109 = vmatprep.subr.mxu0 0.0
    %110 = vmatpush1.msra.mxu0 0.0
    %111 = vmatprep.subr.mxu0 0.0
    %112 = vmatpush1.msra.mxu0 0.0
    %113 = vmatprep.mubr.f32.mxu0 0.0
    %114 = vmatmul.mubr.f32.gmra.mrb[0].mxu0 %v44
    %v115 = vpop.f32.mrb[0].mxu0
    %v116 = vadd.f32 0.0, %v115
    %v117 = vpop.f32.mrb[0].mxu0
    %118 = vmatprep.mubr.f32.mxu0 0.0
    %119 = vmatmul.mubr.f32.gmra.mrb[0].mxu0 %v47
    %v120 = vpop.f32.mrb[0].mxu0
    %v121 = vadd.f32 0.0, %v120
    %v122 = vpop.f32.mrb[0].mxu0
    %123 = vdwg.mxu0
    %v124 = vld [vmem:[%s2] sm:$0xff]
    %v125 = vld [vmem:[%s2 + $0x8] sm:$0xff]
    %v126 = vld [vmem:[%s2 + $0x10] sm:$0xff]
    %v127 = vld [vmem:[%s2 + $0x18] sm:$0xff]
    %v128 = vld [vmem:[%s2 + $0x20] sm:$0xff]
    %v129 = vld [vmem:[%s2 + $0x28] sm:$0xff]
    %v130 = vld [vmem:[%s2 + $0x30] sm:$0xff]
    %v131 = vld [vmem:[%s2 + $0x38] sm:$0xff]
    %132 = vmatprep.subr.mxu0 0.0
    %133 = vmatpush1.msra.mxu0 %v124
    %134 = vmatprep.subr.mxu0 0.0
    %135 = vmatpush1.msra.mxu0 %v125
    %136 = vmatprep.subr.mxu0 0.0
    %137 = vmatpush1.msra.mxu0 %v126
    %138 = vmatprep.subr.mxu0 0.0
    %139 = vmatpush1.msra.mxu0 %v127
    %140 = vmatprep.subr.mxu0 0.0
    %141 = vmatpush1.msra.mxu0 %v128
    %142 = vmatprep.subr.mxu0 0.0
    %143 = vmatpush1.msra.mxu0 %v129
    %144 = vmatprep.subr.mxu0 0.0
    %145 = vmatpush1.msra.mxu0 %v130
    %146 = vmatprep.subr.mxu0 0.0
    %147 = vmatpush1.msra.mxu0 %v131
    %148 = vmatprep.subr.mxu0 0.0
    %149 = vmatpush1.msra.mxu0 0.0
    %150 = vmatprep.subr.mxu0 0.0
    %151 = vmatpush1.msra.mxu0 0.0
    %152 = vmatprep.subr.mxu0 0.0
    %153 = vmatpush1.msra.mxu0 0.0
    %154 = vmatprep.subr.mxu0 0.0
    %155 = vmatpush1.msra.mxu0 0.0
    %156 = vmatprep.subr.mxu0 0.0
    %157 = vmatpush1.msra.mxu0 0.0
    %158 = vmatprep.subr.mxu0 0.0
    %159 = vmatpush1.msra.mxu0 0.0
    %160 = vmatprep.subr.mxu0 0.0
    %161 = vmatpush1.msra.mxu0 0.0
    %162 = vmatprep.subr.mxu0 0.0
    %163 = vmatpush1.msra.mxu0 0.0
    %164 = vmatprep.subr.mxu0 0.0
    %165 = vmatpush1.msra.mxu0 0.0
    %166 = vmatprep.subr.mxu0 0.0
    %167 = vmatpush1.msra.mxu0 0.0
    %168 = vmatprep.subr.mxu0 0.0
    %169 = vmatpush1.msra.mxu0 0.0
    %170 = vmatprep.subr.mxu0 0.0
    %171 = vmatpush1.msra.mxu0 0.0
    %172 = vmatprep.subr.mxu0 0.0
    %173 = vmatpush1.msra.mxu0 0.0
    %174 = vmatprep.subr.mxu0 0.0
    %175 = vmatpush1.msra.mxu0 0.0
    %176 = vmatprep.subr.mxu0 0.0
    %177 = vmatpush1.msra.mxu0 0.0
    %178 = vmatprep.subr.mxu0 0.0
    %179 = vmatpush1.msra.mxu0 0.0
    %180 = vmatprep.subr.mxu0 0.0
    %181 = vmatpush1.msra.mxu0 0.0
    %182 = vmatprep.subr.mxu0 0.0
    %183 = vmatpush1.msra.mxu0 0.0
    %184 = vmatprep.subr.mxu0 0.0
    %185 = vmatpush1.msra.mxu0 0.0
    %186 = vmatprep.subr.mxu0 0.0
    %187 = vmatpush1.msra.mxu0 0.0
    %188 = vmatprep.subr.mxu0 0.0
    %189 = vmatpush1.msra.mxu0 0.0
    %190 = vmatprep.subr.mxu0 0.0
    %191 = vmatpush1.msra.mxu0 0.0
    %192 = vmatprep.subr.mxu0 0.0
    %193 = vmatpush1.msra.mxu0 0.0
    %194 = vmatprep.subr.mxu0 0.0
    %195 = vmatpush1.msra.mxu0 0.0
    %196 = vmatprep.mubr.f32.mxu0 0.0
    %197 = vmatmul.mubr.f32.gmra.mrb[0].mxu0 %v44
    %v198 = vpop.f32.mrb[0].mxu0
    %v199 = vadd.f32 0.0, %v198
    %v200 = vpop.f32.mrb[0].mxu0
    %201 = vmatprep.mubr.f32.mxu0 0.0
    %202 = vmatmul.mubr.f32.gmra.mrb[0].mxu0 %v47
    %v203 = vpop.f32.mrb[0].mxu0
    %v204 = vadd.f32 0.0, %v203
    %v205 = vpop.f32.mrb[0].mxu0
    %206 = vdwg.mxu0
    %vm207 = vcmask 261120
    %208 = vst.msk [vmem:[#allocation2] sm:$0xff] %vm207, %v116
    %209 = vst.msk [vmem:[#allocation2 + $0x8] sm:$0xff] %vm207, %v121
    %v210 = vmax.f32 %v199, 0.0
    %v211 = vmax.f32 %v204, 0.0
    %v212 = vand.u32 2147483647, %v199
    %v213 = vand.u32 2147483647, %v204
    %v214 = vsub.f32 0.0, %v212
    %v215 = vsub.f32 0.0, %v213
    %v216 = vmul.f32 %v214, 1.442695
    %v217 = vpow.pop %v216
    %v218 = vmul.f32 %v215, 1.442695
    %v219 = vpow.pop %v218
    %v220 = vadd.f32 %v217, 1.0
    %v221 = vlog2.pop %v220
    %v222 = vmul.f32 %v221, 0.6931472
    %v223 = vmul.f32 -0.5, %v217
    %v224 = vadd.f32 %v223, 1.0
    %v225 = vmul.f32 %v224, %v217
    %v226 = vand.u32 2147483647, %v217
    %vm227 = vcmp.lt.f32.partialorder %v226, 0.0004427343
    %v228 = vsel %vm227, %v225, %v222
    %v229 = vadd.f32 %v219, 1.0
    %v230 = vlog2.pop %v229
    %v231 = vmul.f32 %v230, 0.6931472
    %v232 = vmul.f32 -0.5, %v219
    %v233 = vadd.f32 %v232, 1.0
    %v234 = vmul.f32 %v233, %v219
    %v235 = vand.u32 2147483647, %v219
    %vm236 = vcmp.lt.f32.partialorder %v235, 0.0004427343
    %v237 = vsel %vm236, %v234, %v231
    %v238 = vadd.f32 %v210, %v228
    %v239 = vadd.f32 %v211, %v237
    %240 = vst.msk [vmem:[#allocation4] sm:$0xff] %vm207, %v238
    %241 = vst.msk [vmem:[#allocation4 + $0x8] sm:$0xff] %vm207, %v239
    // Predicated region
    $region14: #{tpu_custom_call.1} parent=1 // pred_check
      _
    $region15: #{tpu_custom_call.1} parent=1 // pred_check_branch
      %243 = sbr.rel (0) target = $region17
    $region16: #{tpu_custom_call.1} parent=1 // pred_region
      %s245 = ssub.s32 256, 256
      %246 = vsyncadd [#allocation3], %s245
      %s247 = sshll.u32 [#allocation2], 4
      %s248 = int_to_ptr.vmem [resolvable:$true] %s247
      %253 = dma.vmem_to_hbm [thread:$0]  %s248, 256, %s3, [#allocation3], 128, 128, 8
    $region17: #{tpu_custom_call.1} parent=1 // pred_fallthru
      _
    // Predicated region
    $region18: #{tpu_custom_call.1} parent=1 // pred_check
      _
    $region19: #{tpu_custom_call.1} parent=1 // pred_check_branch
      %255 = sbr.rel (0) target = $region21
    $region20: #{tpu_custom_call.1} parent=1 // pred_region
      %s257 = ssub.s32 256, 256
      %258 = vsyncadd [#allocation5], %s257
      %s259 = sshll.u32 [#allocation4], 4
      %s260 = int_to_ptr.vmem [resolvable:$true] %s259
      %265 = dma.vmem_to_hbm [thread:$0]  %s260, 256, %s4, [#allocation5], 128, 128, 8
    $region21: #{tpu_custom_call.1} parent=1 // pred_fallthru
      _
    // Predicated region
    $region22: #{tpu_custom_call.1} parent=1 // pred_check
      _
    $region23: #{tpu_custom_call.1} parent=1 // pred_check_branch
      %267 = sbr.rel (0) target = $region25
    $region24: #{tpu_custom_call.1} parent=1 // pred_region
      %268 = dma.done [#allocation3], 256
    $region25: #{tpu_custom_call.1} parent=1 // pred_fallthru
      _
    // Predicated region
    $region26: #{tpu_custom_call.1} parent=1 // pred_check
      _
    $region27: #{tpu_custom_call.1} parent=1 // pred_check_branch
      %270 = sbr.rel (0) target = $region29
    $region28: #{tpu_custom_call.1} parent=1 // pred_region
      %271 = dma.done [#allocation5], 256
    $region29: #{tpu_custom_call.1} parent=1 // pred_fallthru
      _
    %272 = vsyncpa [#allocation3], 1
    %273 = vsyncpa [#allocation5], 1

</llo_original>
